<compile_context>
chip_gen: v7x
topology: tpu7x:2x2x1
jax: 0.10.0
libtpu: 0.0.40
codegen_flags: <defaults>
</compile_context>

<pallas_src>
import functools

import jax
import jax.numpy as jnp
from jax.experimental import pallas as pl
from jax.experimental.pallas import tpu as pltpu


def mlp_kernel(x_ref,
               w1_ref, b1_ref,
               w2_ref, b2_ref,
               w3_ref, b3_ref,
               w4_ref, b4_ref,
               out_ref):
    # Input block arrives as f32; cast to bf16 in-kernel (avoids a separate
    # wrapper-side cast pass over HBM). All matmuls accumulate in f32.
    x = x_ref[...].astype(jnp.bfloat16)  # (TM, 784)

    h1 = jnp.dot(x, w1_ref[...], preferred_element_type=jnp.float32) + b1_ref[...]
    h1 = jnp.maximum(h1, 0.0).astype(jnp.bfloat16)

    h2 = jnp.dot(h1, w2_ref[...], preferred_element_type=jnp.float32) + b2_ref[...]
    h2 = jnp.maximum(h2, 0.0).astype(jnp.bfloat16)

    h3 = jnp.dot(h2, w3_ref[...], preferred_element_type=jnp.float32) + b3_ref[...]
    h3 = jnp.maximum(h3, 0.0).astype(jnp.bfloat16)

    logits = jnp.dot(h3, w4_ref[...], preferred_element_type=jnp.float32) + b4_ref[...]
    out_ref[...] = logits.astype(out_ref.dtype)


def _ceil_to(n, m):
    return ((n + m - 1) // m) * m


def _select_tile(B, tm):
    """Batch tile selection.

    - Big tiles amortize the ~0.35 us per-grid-step pipeline overhead.
    - For ragged batches, cap TM near ceil(B/2) so padding waste is bounded
      and (when B > 8) there are >= 2 grid steps, letting v7x's two
      TensorCores both run on the "parallel" batch axis.
    """
    if B <= 8:
        return 8
    half = _ceil_to(pl.cdiv(B, 2), 8)
    return max(8, min(tm, half))


def prepare_params(params):
    """One-time param preprocessing (hoisted out of the per-call path):
    weights -> bf16 in (in, out) layout, biases -> (1, N) f32."""
    return tuple(
        (jnp.asarray(w, jnp.bfloat16), jnp.asarray(b, jnp.float32).reshape(1, -1))
        for (w, b) in params
    )


@functools.partial(jax.jit, static_argnames=("tm",))
def fashion_mnist_net(x, prepped_params, *, tm=2048):
    """x: (B, 1, 28, 28) or (B, 784) float32. Returns (B, 10) float32 logits."""
    x2d = x.reshape(-1, 28 * 28).astype(jnp.float32)  # torch x.view(-1, 784)
    B = x2d.shape[0]

    TM = _select_tile(B, tm)
    B_pad = _ceil_to(B, TM)
    if B_pad != B:
        x2d = jnp.pad(x2d, ((0, B_pad - B), (0, 0)))

    (w1, b1), (w2, b2), (w3, b3), (w4, b4) = prepped_params

    # Weights/biases: constant block index -> DMA'd once, VMEM-resident.
    resident = lambda a: pl.BlockSpec(a.shape, lambda i: (0, 0))

    out = pl.pallas_call(
        mlp_kernel,
        out_shape=jax.ShapeDtypeStruct((B_pad, 10), jnp.float32),
        grid=(B_pad // TM,),
        in_specs=[pl.BlockSpec((TM, 28 * 28), lambda i: (i, 0)),  # streamed f32 input
                  resident(w1), resident(b1),
                  resident(w2), resident(b2),
                  resident(w3), resident(b3),
                  resident(w4), resident(b4)],
        out_specs=pl.BlockSpec((TM, 10), lambda i: (i, 0)),
        compiler_params=pltpu.CompilerParams(
            dimension_semantics=("parallel",),   # megacore sharding on v7x
            vmem_limit_bytes=32 * 1024 * 1024,   # covers v5e 16 MiB default at TM=2048
        ),
    )(x2d, w1, b1, w2, b2, w3, b3, w4, b4)

    return out[:B]


def init_params(key):
    """Deterministic init matching nn.Linear shapes (weights stored as (in, out))."""
    dims = [(28 * 28, 256), (256, 128), (128, 64), (64, 10)]
    params = []
    for fan_in, fan_out in dims:
        key, kw, kb = jax.random.split(key, 3)
        bound = 1.0 / jnp.sqrt(fan_in)
        w = jax.random.uniform(kw, (fan_in, fan_out), jnp.float32, -bound, bound)
        b = jax.random.uniform(kb, (fan_out,), jnp.float32, -bound, bound)
        params.append((w, b))
    return params


if __name__ == "__main__":
    key = jax.random.PRNGKey(0)
    key, kx = jax.random.split(key)

    # Small batch of NCHW FashionMNIST-shaped inputs.
    x = jax.random.normal(kx, (8, 1, 28, 28), jnp.float32)
    params = init_params(key)
    prepped = prepare_params(params)   # one-time bf16/reshape prep, hoisted

    logits = fashion_mnist_net(x, prepped)
    jax.block_until_ready(logits)

    # Reference check in plain JAX f32 (same math, same params). Tolerance is
    # loosened because the kernel uses bf16 inputs/weights with f32 accumulate.
    x2d = x.reshape(-1, 28 * 28)
    ref = x2d
    for i, (w, b) in enumerate(params):
        ref = ref @ w + b
        if i < 3:
            ref = jnp.maximum(ref, 0.0)
    assert logits.shape == (8, 10)
    assert jnp.allclose(logits, ref, atol=7.5e-2, rtol=7.5e-2), \
        float(jnp.max(jnp.abs(logits - ref)))

    print("KERNEL_OK")
</pallas_src>

<mosaic_0001>
module attributes {stable_mosaic.version = 11 : i64} {
  func.func @mlp_kernel(%arg0: i32, %arg1: memref<8x784xf32, #tpu.memory_space<vmem>>, %arg2: memref<784x256xbf16, #tpu.memory_space<vmem>>, %arg3: memref<1x256xf32, #tpu.memory_space<vmem>>, %arg4: memref<256x128xbf16, #tpu.memory_space<vmem>>, %arg5: memref<1x128xf32, #tpu.memory_space<vmem>>, %arg6: memref<128x64xbf16, #tpu.memory_space<vmem>>, %arg7: memref<1x64xf32, #tpu.memory_space<vmem>>, %arg8: memref<64x10xbf16, #tpu.memory_space<vmem>>, %arg9: memref<1x10xf32, #tpu.memory_space<vmem>>, %arg10: memref<8x10xf32, #tpu.memory_space<vmem>>) attributes {dimension_semantics = [#tpu.dimension_semantics<parallel>], iteration_bounds = array<i64: 1>, scalar_prefetch = 0 : i64, scratch_operands = 0 : i64, tpu.core_type = #tpu.core_type<tc>, window_params = [{transform_indices = @transform_0, window_bounds = array<i64: 8, 784>}, {pipeline_mode = #tpu.pipeline_mode<synchronous>, transform_indices = @transform_1, window_bounds = array<i64: 784, 256>}, {pipeline_mode = #tpu.pipeline_mode<synchronous>, transform_indices = @transform_2, window_bounds = array<i64: 1, 256>}, {pipeline_mode = #tpu.pipeline_mode<synchronous>, transform_indices = @transform_3, window_bounds = array<i64: 256, 128>}, {pipeline_mode = #tpu.pipeline_mode<synchronous>, transform_indices = @transform_4, window_bounds = array<i64: 1, 128>}, {pipeline_mode = #tpu.pipeline_mode<synchronous>, transform_indices = @transform_5, window_bounds = array<i64: 128, 64>}, {pipeline_mode = #tpu.pipeline_mode<synchronous>, transform_indices = @transform_6, window_bounds = array<i64: 1, 64>}, {pipeline_mode = #tpu.pipeline_mode<synchronous>, transform_indices = @transform_7, window_bounds = array<i64: 64, 10>}, {pipeline_mode = #tpu.pipeline_mode<synchronous>, transform_indices = @transform_8, window_bounds = array<i64: 1, 10>}, {transform_indices = @transform_9, window_bounds = array<i64: 8, 10>}]} {
    %c0 = arith.constant 0 : index
    %c0_0 = arith.constant 0 : index
    %0 = vector.load %arg1[%c0, %c0_0] : memref<8x784xf32, #tpu.memory_space<vmem>>, vector<8x784xf32>
    %1 = arith.truncf %0 : vector<8x784xf32> to vector<8x784xbf16>
    %c0_1 = arith.constant 0 : index
    %c0_2 = arith.constant 0 : index
    %2 = vector.load %arg2[%c0_1, %c0_2] : memref<784x256xbf16, #tpu.memory_space<vmem>>, vector<784x256xbf16>
    %cst = arith.constant dense<0.000000e+00> : vector<8x256xf32>
    %3 = tpu.matmul %1, %2, %cst {dimension_numbers = #tpu.dot_dimension_numbers<[1], [0], [0], [1], [0, 0, 1, 1], [], []>} : vector<8x784xbf16>, vector<784x256xbf16>, vector<8x256xf32> -> vector<8x256xf32>
    %c0_3 = arith.constant 0 : index
    %c0_4 = arith.constant 0 : index
    %4 = vector.load %arg3[%c0_3, %c0_4] : memref<1x256xf32, #tpu.memory_space<vmem>>, vector<1x256xf32>
    %5 = vector.broadcast %4 : vector<1x256xf32> to vector<8x256xf32>
    %6 = arith.addf %3, %5 : vector<8x256xf32>
    %cst_5 = arith.constant 0.000000e+00 : f32
    %7 = vector.broadcast %cst_5 : f32 to vector<8x256xf32>
    %8 = arith.maximumf %6, %7 : vector<8x256xf32>
    %9 = arith.truncf %8 : vector<8x256xf32> to vector<8x256xbf16>
    %c0_6 = arith.constant 0 : index
    %c0_7 = arith.constant 0 : index
    %10 = vector.load %arg4[%c0_6, %c0_7] : memref<256x128xbf16, #tpu.memory_space<vmem>>, vector<256x128xbf16>
    %cst_8 = arith.constant dense<0.000000e+00> : vector<8x128xf32>
    %11 = tpu.matmul %9, %10, %cst_8 {dimension_numbers = #tpu.dot_dimension_numbers<[1], [0], [0], [1], [0, 0, 1, 1], [], []>} : vector<8x256xbf16>, vector<256x128xbf16>, vector<8x128xf32> -> vector<8x128xf32>
    %c0_9 = arith.constant 0 : index
    %c0_10 = arith.constant 0 : index
    %12 = vector.load %arg5[%c0_9, %c0_10] : memref<1x128xf32, #tpu.memory_space<vmem>>, vector<1x128xf32>
    %13 = vector.broadcast %12 : vector<1x128xf32> to vector<8x128xf32>
    %14 = arith.addf %11, %13 : vector<8x128xf32>
    %cst_11 = arith.constant 0.000000e+00 : f32
    %15 = vector.broadcast %cst_11 : f32 to vector<8x128xf32>
    %16 = arith.maximumf %14, %15 : vector<8x128xf32>
    %17 = arith.truncf %16 : vector<8x128xf32> to vector<8x128xbf16>
    %c0_12 = arith.constant 0 : index
    %c0_13 = arith.constant 0 : index
    %18 = vector.load %arg6[%c0_12, %c0_13] : memref<128x64xbf16, #tpu.memory_space<vmem>>, vector<128x64xbf16>
    %cst_14 = arith.constant dense<0.000000e+00> : vector<8x64xf32>
    %19 = tpu.matmul %17, %18, %cst_14 {dimension_numbers = #tpu.dot_dimension_numbers<[1], [0], [0], [1], [0, 0, 1, 1], [], []>} : vector<8x128xbf16>, vector<128x64xbf16>, vector<8x64xf32> -> vector<8x64xf32>
    %c0_15 = arith.constant 0 : index
    %c0_16 = arith.constant 0 : index
    %20 = vector.load %arg7[%c0_15, %c0_16] : memref<1x64xf32, #tpu.memory_space<vmem>>, vector<1x64xf32>
    %21 = vector.broadcast %20 : vector<1x64xf32> to vector<8x64xf32>
    %22 = arith.addf %19, %21 : vector<8x64xf32>
    %cst_17 = arith.constant 0.000000e+00 : f32
    %23 = vector.broadcast %cst_17 : f32 to vector<8x64xf32>
    %24 = arith.maximumf %22, %23 : vector<8x64xf32>
    %25 = arith.truncf %24 : vector<8x64xf32> to vector<8x64xbf16>
    %c0_18 = arith.constant 0 : index
    %c0_19 = arith.constant 0 : index
    %26 = vector.load %arg8[%c0_18, %c0_19] : memref<64x10xbf16, #tpu.memory_space<vmem>>, vector<64x10xbf16>
    %cst_20 = arith.constant dense<0.000000e+00> : vector<8x10xf32>
    %27 = tpu.matmul %25, %26, %cst_20 {dimension_numbers = #tpu.dot_dimension_numbers<[1], [0], [0], [1], [0, 0, 1, 1], [], []>} : vector<8x64xbf16>, vector<64x10xbf16>, vector<8x10xf32> -> vector<8x10xf32>
    %c0_21 = arith.constant 0 : index
    %c0_22 = arith.constant 0 : index
    %28 = vector.load %arg9[%c0_21, %c0_22] : memref<1x10xf32, #tpu.memory_space<vmem>>, vector<1x10xf32>
    %29 = vector.broadcast %28 : vector<1x10xf32> to vector<8x10xf32>
    %30 = arith.addf %27, %29 : vector<8x10xf32>
    %c0_23 = arith.constant 0 : index
    %c0_24 = arith.constant 0 : index
    %31 = vector.load %arg10[%c0_23, %c0_24] : memref<8x10xf32, #tpu.memory_space<vmem>>, vector<8x10xf32>
    tpu.vector_store %arg10[%c0_23, %c0_24], %30 {strides = array<i32>} : memref<8x10xf32, #tpu.memory_space<vmem>>, vector<8x10xf32>,
    return
  }
  func.func @transform_0(%arg0: i32) -> (i32, i32) {
    %c0_i32 = arith.constant 0 : i32
    %c0_i32_0 = arith.constant 0 : i32
    return %arg0, %c0_i32 : i32, i32
  }
  func.func @transform_1(%arg0: i32) -> (i32, i32) {
    %c0_i32 = arith.constant 0 : i32
    %c0_i32_0 = arith.constant 0 : i32
    %c0_i32_1 = arith.constant 0 : i32
    return %c0_i32, %c0_i32_0 : i32, i32
  }
  func.func @transform_2(%arg0: i32) -> (i32, i32) {
    %c0_i32 = arith.constant 0 : i32
    %c0_i32_0 = arith.constant 0 : i32
    %c0_i32_1 = arith.constant 0 : i32
    return %c0_i32, %c0_i32_0 : i32, i32
  }
  func.func @transform_3(%arg0: i32) -> (i32, i32) {
    %c0_i32 = arith.constant 0 : i32
    %c0_i32_0 = arith.constant 0 : i32
    %c0_i32_1 = arith.constant 0 : i32
    return %c0_i32, %c0_i32_0 : i32, i32
  }
  func.func @transform_4(%arg0: i32) -> (i32, i32) {
    %c0_i32 = arith.constant 0 : i32
    %c0_i32_0 = arith.constant 0 : i32
    %c0_i32_1 = arith.constant 0 : i32
    return %c0_i32, %c0_i32_0 : i32, i32
  }
  func.func @transform_5(%arg0: i32) -> (i32, i32) {
    %c0_i32 = arith.constant 0 : i32
    %c0_i32_0 = arith.constant 0 : i32
    %c0_i32_1 = arith.constant 0 : i32
    return %c0_i32, %c0_i32_0 : i32, i32
  }
  func.func @transform_6(%arg0: i32) -> (i32, i32) {
    %c0_i32 = arith.constant 0 : i32
    %c0_i32_0 = arith.constant 0 : i32
    %c0_i32_1 = arith.constant 0 : i32
    return %c0_i32, %c0_i32_0 : i32, i32
  }
  func.func @transform_7(%arg0: i32) -> (i32, i32) {
    %c0_i32 = arith.constant 0 : i32
    %c0_i32_0 = arith.constant 0 : i32
    %c0_i32_1 = arith.constant 0 : i32
    return %c0_i32, %c0_i32_0 : i32, i32
  }
  func.func @transform_8(%arg0: i32) -> (i32, i32) {
    %c0_i32 = arith.constant 0 : i32
    %c0_i32_0 = arith.constant 0 : i32
    %c0_i32_1 = arith.constant 0 : i32
    return %c0_i32, %c0_i32_0 : i32, i32
  }
  func.func @transform_9(%arg0: i32) -> (i32, i32) {
    %c0_i32 = arith.constant 0 : i32
    %c0_i32_0 = arith.constant 0 : i32
    return %arg0, %c0_i32 : i32, i32
  }
}

</mosaic_0001>

<llo_original>
// kernel: fashion_mnist_net.1
$region0: #{fashion_mnist_net.1}
  #allocation0 [shape = 'u32[]', space=smem, size = 0x4, offset = 0x4, fixed_abs, tag = 'smem constant byte address 0x4 - core index']
  #allocation1 [shape = 'u32[144,128]{1,0:T(1,128)}', space=vmem, size = 0x12000, scoped, tag = 'internal scratch']
  %s0 = inlined_call_operand.vmem [shape: f32[8,784], index: 0, kind: input, shape index: {}]
  %s1 = inlined_call_operand.vmem [shape: bf16[784,256], index: 1, kind: input, shape index: {}]
  %s2 = inlined_call_operand.vmem [shape: f32[1,256], index: 2, kind: input, shape index: {}]
  %s3 = inlined_call_operand.vmem [shape: bf16[256,128], index: 3, kind: input, shape index: {}]
  %s4 = inlined_call_operand.vmem [shape: f32[1,128], index: 4, kind: input, shape index: {}]
  %s5 = inlined_call_operand.vmem [shape: bf16[128,64], index: 5, kind: input, shape index: {}]
  %s6 = inlined_call_operand.vmem [shape: f32[1,64], index: 6, kind: input, shape index: {}]
  %s7 = inlined_call_operand.vmem [shape: bf16[64,10], index: 7, kind: input, shape index: {}]
  %s8 = inlined_call_operand.vmem [shape: f32[1,10], index: 8, kind: input, shape index: {}]
  %s9 = inlined_call_operand.hbm [shape: f32[8,10], index: 9, kind: output, shape index: {}]
  %s10 = sld [smem:[#allocation0]]
  $region46: #{fashion_mnist_net.1} parent=0
    _
  %s12 = ssub.s32 1, %s10
  %s13 = scalar_select 0, %s12, %s10
  $region1: #{fashion_mnist_net.1} parent=0
    #allocation2 [shape = 'u8[4096]{0}', space=vmem, size = 0x1000, scoped, tag = 'output window, operand 0, single buffered']
    #allocation3 [shape = 's32[1]{0}', space=sflag, size = 0x4, scoped, tag = 'scoped memory for fashion_mnist_net.1']
    %14 = vsyncpa [#allocation3], 0
    // Predicated region
    $region2: #{fashion_mnist_net.1} parent=1 // pred_check
      _
    $region3: #{fashion_mnist_net.1} parent=1 // pred_check_branch
      %16 = sbr.rel (0) target = $region5
    $region4: #{fashion_mnist_net.1} parent=1 // pred_region
      _
    $region5: #{fashion_mnist_net.1} parent=1 // pred_fallthru
      _
    // Predicated region
    $region6: #{fashion_mnist_net.1} parent=1 // pred_check
      _
    $region7: #{fashion_mnist_net.1} parent=1 // pred_check_branch
      %18 = sbr.rel (0) target = $region9
    $region8: #{fashion_mnist_net.1} parent=1 // pred_region
      _
    $region9: #{fashion_mnist_net.1} parent=1 // pred_fallthru
      _
    // Predicated region
    $region10: #{fashion_mnist_net.1} parent=1 // pred_check
      _
    $region11: #{fashion_mnist_net.1} parent=1 // pred_check_branch
      %20 = sbr.rel (0) target = $region13
    $region12: #{fashion_mnist_net.1} parent=1 // pred_region
      _
    $region13: #{fashion_mnist_net.1} parent=1 // pred_fallthru
      _
    // Predicated region
    $region14: #{fashion_mnist_net.1} parent=1 // pred_check
      _
    $region15: #{fashion_mnist_net.1} parent=1 // pred_check_branch
      %22 = sbr.rel (0) target = $region17
    $region16: #{fashion_mnist_net.1} parent=1 // pred_region
      _
    $region17: #{fashion_mnist_net.1} parent=1 // pred_fallthru
      _
    // Predicated region
    $region18: #{fashion_mnist_net.1} parent=1 // pred_check
      _
    $region19: #{fashion_mnist_net.1} parent=1 // pred_check_branch
      %24 = sbr.rel (0) target = $region21
    $region20: #{fashion_mnist_net.1} parent=1 // pred_region
      _
    $region21: #{fashion_mnist_net.1} parent=1 // pred_fallthru
      _
    // Predicated region
    $region22: #{fashion_mnist_net.1} parent=1 // pred_check
      _
    $region23: #{fashion_mnist_net.1} parent=1 // pred_check_branch
      %26 = sbr.rel (0) target = $region25
    $region24: #{fashion_mnist_net.1} parent=1 // pred_region
      _
    $region25: #{fashion_mnist_net.1} parent=1 // pred_fallthru
      _
    // Predicated region
    $region26: #{fashion_mnist_net.1} parent=1 // pred_check
      _
    $region27: #{fashion_mnist_net.1} parent=1 // pred_check_branch
      %28 = sbr.rel (0) target = $region29
    $region28: #{fashion_mnist_net.1} parent=1 // pred_region
      _
    $region29: #{fashion_mnist_net.1} parent=1 // pred_fallthru
      _
    // Predicated region
    $region30: #{fashion_mnist_net.1} parent=1 // pred_check
      _
    $region31: #{fashion_mnist_net.1} parent=1 // pred_check_branch
      %30 = sbr.rel (0) target = $region33
    $region32: #{fashion_mnist_net.1} parent=1 // pred_region
      _
    $region33: #{fashion_mnist_net.1} parent=1 // pred_fallthru
      _
    // Predicated region
    $region34: #{fashion_mnist_net.1} parent=1 // pred_check
      _
    $region35: #{fashion_mnist_net.1} parent=1 // pred_check_branch
      %32 = sbr.rel (0) target = $region37
    $region36: #{fashion_mnist_net.1} parent=1 // pred_region
      _
    $region37: #{fashion_mnist_net.1} parent=1 // pred_fallthru
      _
    %v34 = vld [vmem:[%s0] sm:$0xff]
    %v35 = vld [vmem:[%s0 + $0x8] sm:$0xff]
    %v36 = vld [vmem:[%s0 + $0x10] sm:$0xff]
    %v37 = vld [vmem:[%s0 + $0x18] sm:$0xff]
    %v38 = vld [vmem:[%s0 + $0x20] sm:$0xff]
    %v39 = vld [vmem:[%s0 + $0x28] sm:$0xff]
    %v40 = vld [vmem:[%s0 + $0x30] sm:$0xff]
    %v41 = vpack.c.bf16 %v34, %v34
    %v42 = vpack.c.bf16 %v35, %v35
    %v43 = vpack.c.bf16 %v36, %v36
    %v44 = vpack.c.bf16 %v37, %v37
    %v45 = vpack.c.bf16 %v38, %v38
    %v46 = vpack.c.bf16 %v39, %v39
    %v47 = vpack.c.bf16 %v40, %v40
    %v48 = vld [vmem:[%s1] sm:$0xff]
    %v49 = vld [vmem:[%s1 + $0x8] sm:$0xff]
    %v50 = vld [vmem:[%s1 + $0x10] sm:$0xff]
    %v51 = vld [vmem:[%s1 + $0x18] sm:$0xff]
    %v52 = vld [vmem:[%s1 + $0x20] sm:$0xff]
    %v53 = vld [vmem:[%s1 + $0x28] sm:$0xff]
    %v54 = vld [vmem:[%s1 + $0x30] sm:$0xff]
    %v55 = vld [vmem:[%s1 + $0x38] sm:$0xff]
    %v56 = vld [vmem:[%s1 + $0x40] sm:$0xff]
    %v57 = vld [vmem:[%s1 + $0x48] sm:$0xff]
    %v58 = vld [vmem:[%s1 + $0x50] sm:$0xff]
    %v59 = vld [vmem:[%s1 + $0x58] sm:$0xff]
    %v60 = vld [vmem:[%s1 + $0x60] sm:$0xff]
    %v61 = vld [vmem:[%s1 + $0x68] sm:$0xff]
    %v62 = vld [vmem:[%s1 + $0x70] sm:$0xff]
    %v63 = vld [vmem:[%s1 + $0x78] sm:$0xff]
    %v64 = vld [vmem:[%s1 + $0x80] sm:$0xff]
    %v65 = vld [vmem:[%s1 + $0x88] sm:$0xff]
    %v66 = vld [vmem:[%s1 + $0x90] sm:$0xff]
    %v67 = vld [vmem:[%s1 + $0x98] sm:$0xff]
    %v68 = vld [vmem:[%s1 + $0xa0] sm:$0xff]
    %v69 = vld [vmem:[%s1 + $0xa8] sm:$0xff]
    %v70 = vld [vmem:[%s1 + $0xb0] sm:$0xff]
    %v71 = vld [vmem:[%s1 + $0xb8] sm:$0xff]
    %v72 = vld [vmem:[%s1 + $0xc0] sm:$0xff]
    %v73 = vld [vmem:[%s1 + $0xc8] sm:$0xff]
    %v74 = vld [vmem:[%s1 + $0xd0] sm:$0xff]
    %v75 = vld [vmem:[%s1 + $0xd8] sm:$0xff]
    %v76 = vld [vmem:[%s1 + $0xe0] sm:$0xff]
    %v77 = vld [vmem:[%s1 + $0xe8] sm:$0xff]
    %v78 = vld [vmem:[%s1 + $0xf0] sm:$0xff]
    %v79 = vld [vmem:[%s1 + $0xf8] sm:$0xff]
    %v80 = vld [vmem:[%s1 + $0x100] sm:$0xff]
    %v81 = vld [vmem:[%s1 + $0x108] sm:$0xff]
    %v82 = vld [vmem:[%s1 + $0x110] sm:$0xff]
    %v83 = vld [vmem:[%s1 + $0x118] sm:$0xff]
    %v84 = vld [vmem:[%s1 + $0x120] sm:$0xff]
    %v85 = vld [vmem:[%s1 + $0x128] sm:$0xff]
    %v86 = vld [vmem:[%s1 + $0x130] sm:$0xff]
    %v87 = vld [vmem:[%s1 + $0x138] sm:$0xff]
    %v88 = vld [vmem:[%s1 + $0x140] sm:$0xff]
    %v89 = vld [vmem:[%s1 + $0x148] sm:$0xff]
    %v90 = vld [vmem:[%s1 + $0x150] sm:$0xff]
    %v91 = vld [vmem:[%s1 + $0x158] sm:$0xff]
    %v92 = vld [vmem:[%s1 + $0x160] sm:$0xff]
    %v93 = vld [vmem:[%s1 + $0x168] sm:$0xff]
    %v94 = vld [vmem:[%s1 + $0x170] sm:$0xff]
    %v95 = vld [vmem:[%s1 + $0x178] sm:$0xff]
    %v96 = vld [vmem:[%s1 + $0x180] sm:$0xff]
    %v97 = vld [vmem:[%s1 + $0x188] sm:$0xff]
    %v98 = vld [vmem:[%s1 + $0x190] sm:$0xff]
    %v99 = vld [vmem:[%s1 + $0x198] sm:$0xff]
    %v100 = vld [vmem:[%s1 + $0x1a0] sm:$0xff]
    %v101 = vld [vmem:[%s1 + $0x1a8] sm:$0xff]
    %v102 = vld [vmem:[%s1 + $0x1b0] sm:$0xff]
    %v103 = vld [vmem:[%s1 + $0x1b8] sm:$0xff]
    %v104 = vld [vmem:[%s1 + $0x1c0] sm:$0xff]
    %v105 = vld [vmem:[%s1 + $0x1c8] sm:$0xff]
    %v106 = vld [vmem:[%s1 + $0x1d0] sm:$0xff]
    %v107 = vld [vmem:[%s1 + $0x1d8] sm:$0xff]
    %v108 = vld [vmem:[%s1 + $0x1e0] sm:$0xff]
    %v109 = vld [vmem:[%s1 + $0x1e8] sm:$0xff]
    %v110 = vld [vmem:[%s1 + $0x1f0] sm:$0xff]
    %v111 = vld [vmem:[%s1 + $0x1f8] sm:$0xff]
    %v112 = vld [vmem:[%s1 + $0x200] sm:$0xff]
    %v113 = vld [vmem:[%s1 + $0x208] sm:$0xff]
    %v114 = vld [vmem:[%s1 + $0x210] sm:$0xff]
    %v115 = vld [vmem:[%s1 + $0x218] sm:$0xff]
    %v116 = vld [vmem:[%s1 + $0x220] sm:$0xff]
    %v117 = vld [vmem:[%s1 + $0x228] sm:$0xff]
    %v118 = vld [vmem:[%s1 + $0x230] sm:$0xff]
    %v119 = vld [vmem:[%s1 + $0x238] sm:$0xff]
    %v120 = vld [vmem:[%s1 + $0x240] sm:$0xff]
    %v121 = vld [vmem:[%s1 + $0x248] sm:$0xff]
    %v122 = vld [vmem:[%s1 + $0x250] sm:$0xff]
    %v123 = vld [vmem:[%s1 + $0x258] sm:$0xff]
    %v124 = vld [vmem:[%s1 + $0x260] sm:$0xff]
    %v125 = vld [vmem:[%s1 + $0x268] sm:$0xff]
    %v126 = vld [vmem:[%s1 + $0x270] sm:$0xff]
    %v127 = vld [vmem:[%s1 + $0x278] sm:$0xff]
    %v128 = vld [vmem:[%s1 + $0x280] sm:$0xff]
    %v129 = vld [vmem:[%s1 + $0x288] sm:$0xff]
    %v130 = vld [vmem:[%s1 + $0x290] sm:$0xff]
    %v131 = vld [vmem:[%s1 + $0x298] sm:$0xff]
    %v132 = vld [vmem:[%s1 + $0x2a0] sm:$0xff]
    %v133 = vld [vmem:[%s1 + $0x2a8] sm:$0xff]
    %v134 = vld [vmem:[%s1 + $0x2b0] sm:$0xff]
    %v135 = vld [vmem:[%s1 + $0x2b8] sm:$0xff]
    %v136 = vld [vmem:[%s1 + $0x2c0] sm:$0xff]
    %v137 = vld [vmem:[%s1 + $0x2c8] sm:$0xff]
    %v138 = vld [vmem:[%s1 + $0x2d0] sm:$0xff]
    %v139 = vld [vmem:[%s1 + $0x2d8] sm:$0xff]
    %v140 = vld [vmem:[%s1 + $0x2e0] sm:$0xff]
    %v141 = vld [vmem:[%s1 + $0x2e8] sm:$0xff]
    %v142 = vld [vmem:[%s1 + $0x2f0] sm:$0xff]
    %v143 = vld [vmem:[%s1 + $0x2f8] sm:$0xff]
    %v144 = vld [vmem:[%s1 + $0x300] sm:$0xff]
    %v145 = vld [vmem:[%s1 + $0x308] sm:$0xff]
    %v146 = vld [vmem:[%s2] sm:$0x3]
    %v148 = vlaneseq
    %v149 = vshrl.u32 %v148, 7
    %v150 = vsub.s32 0, %v149
    %v151 = vrot.slane %v146, %v150
    %v152 = vlaneseq
    %v153 = vshrl.u32 %v152, 7
    %v154 = vsub.s32 1, %v153
    %v155 = vrot.slane %v146, %v154
    %v256 = vunpack.c.l.b16 %v48
    %v257 = vunpack.c.h.b16 %v48
    %v258 = vunpack.c.l.b16 %v49
    %v259 = vunpack.c.h.b16 %v49
    %v260 = vunpack.c.l.b16 %v50
    %v261 = vunpack.c.h.b16 %v50
    %v262 = vunpack.c.l.b16 %v51
    %v263 = vunpack.c.h.b16 %v51
    %v264 = vunpack.c.l.b16 %v52
    %v265 = vunpack.c.h.b16 %v52
    %v266 = vunpack.c.l.b16 %v53
    %v267 = vunpack.c.h.b16 %v53
    %v268 = vunpack.c.l.b16 %v54
    %v269 = vunpack.c.h.b16 %v54
    %v270 = vunpack.c.l.b16 %v55
    %v271 = vunpack.c.h.b16 %v55
    %v272 = vunpack.c.l.b16 %v56
    %v273 = vunpack.c.h.b16 %v56
    %v274 = vunpack.c.l.b16 %v57
    %v275 = vunpack.c.h.b16 %v57
    %v276 = vunpack.c.l.b16 %v58
    %v277 = vunpack.c.h.b16 %v58
    %v278 = vunpack.c.l.b16 %v59
    %v279 = vunpack.c.h.b16 %v59
    %v280 = vunpack.c.l.b16 %v60
    %v281 = vunpack.c.h.b16 %v60
    %v282 = vunpack.c.l.b16 %v61
    %v283 = vunpack.c.h.b16 %v61
    %v284 = vunpack.c.l.b16 %v62
    %v285 = vunpack.c.h.b16 %v62
    %v286 = vunpack.c.l.b16 %v63
    %v287 = vunpack.c.h.b16 %v63
    %v288 = vunpack.c.l.b16 %v64
    %v289 = vunpack.c.h.b16 %v64
    %v290 = vunpack.c.l.b16 %v65
    %v291 = vunpack.c.h.b16 %v65
    %v292 = vunpack.c.l.b16 %v66
    %v293 = vunpack.c.h.b16 %v66
    %v294 = vunpack.c.l.b16 %v67
    %v295 = vunpack.c.h.b16 %v67
    %v296 = vunpack.c.l.b16 %v68
    %v297 = vunpack.c.h.b16 %v68
    %v298 = vunpack.c.l.b16 %v69
    %v299 = vunpack.c.h.b16 %v69
    %v300 = vunpack.c.l.b16 %v70
    %v301 = vunpack.c.h.b16 %v70
    %v302 = vunpack.c.l.b16 %v71
    %v303 = vunpack.c.h.b16 %v71
    %v304 = vunpack.c.l.b16 %v72
    %v305 = vunpack.c.h.b16 %v72
    %v306 = vunpack.c.l.b16 %v73
    %v307 = vunpack.c.h.b16 %v73
    %v308 = vunpack.c.l.b16 %v74
    %v309 = vunpack.c.h.b16 %v74
    %v310 = vunpack.c.l.b16 %v75
    %v311 = vunpack.c.h.b16 %v75
    %v312 = vunpack.c.l.b16 %v76
    %v313 = vunpack.c.h.b16 %v76
    %v314 = vunpack.c.l.b16 %v77
    %v315 = vunpack.c.h.b16 %v77
    %v316 = vunpack.c.l.b16 %v78
    %v317 = vunpack.c.h.b16 %v78
    %v318 = vunpack.c.l.b16 %v79
    %v319 = vunpack.c.h.b16 %v79
    %v320 = vunpack.c.l.b16 %v80
    %v321 = vunpack.c.h.b16 %v80
    %v322 = vunpack.c.l.b16 %v81
    %v323 = vunpack.c.h.b16 %v81
    %v324 = vunpack.c.l.b16 %v82
    %v325 = vunpack.c.h.b16 %v82
    %v326 = vunpack.c.l.b16 %v83
    %v327 = vunpack.c.h.b16 %v83
    %v328 = vunpack.c.l.b16 %v84
    %v329 = vunpack.c.h.b16 %v84
    %v330 = vunpack.c.l.b16 %v85
    %v331 = vunpack.c.h.b16 %v85
    %v332 = vunpack.c.l.b16 %v86
    %v333 = vunpack.c.h.b16 %v86
    %v334 = vunpack.c.l.b16 %v87
    %v335 = vunpack.c.h.b16 %v87
    %v336 = vunpack.c.l.b16 %v88
    %v337 = vunpack.c.h.b16 %v88
    %v338 = vunpack.c.l.b16 %v89
    %v339 = vunpack.c.h.b16 %v89
    %v340 = vunpack.c.l.b16 %v90
    %v341 = vunpack.c.h.b16 %v90
    %v342 = vunpack.c.l.b16 %v91
    %v343 = vunpack.c.h.b16 %v91
    %v344 = vunpack.c.l.b16 %v92
    %v345 = vunpack.c.h.b16 %v92
    %v346 = vunpack.c.l.b16 %v93
    %v347 = vunpack.c.h.b16 %v93
    %v348 = vunpack.c.l.b16 %v94
    %v349 = vunpack.c.h.b16 %v94
    %v350 = vunpack.c.l.b16 %v95
    %v351 = vunpack.c.h.b16 %v95
    %v352 = vunpack.c.l.b16 %v96
    %v353 = vunpack.c.h.b16 %v96
    %v354 = vunpack.c.l.b16 %v97
    %v355 = vunpack.c.h.b16 %v97
    %v356 = vunpack.c.l.b16 %v98
    %v357 = vunpack.c.h.b16 %v98
    %v358 = vunpack.c.l.b16 %v99
    %v359 = vunpack.c.h.b16 %v99
    %v360 = vunpack.c.l.b16 %v100
    %v361 = vunpack.c.h.b16 %v100
    %v362 = vunpack.c.l.b16 %v101
    %v363 = vunpack.c.h.b16 %v101
    %v364 = vunpack.c.l.b16 %v102
    %v365 = vunpack.c.h.b16 %v102
    %v366 = vunpack.c.l.b16 %v103
    %v367 = vunpack.c.h.b16 %v103
    %v368 = vunpack.c.l.b16 %v104
    %v369 = vunpack.c.h.b16 %v104
    %v370 = vunpack.c.l.b16 %v105
    %v371 = vunpack.c.h.b16 %v105
    %v372 = vunpack.c.l.b16 %v106
    %v373 = vunpack.c.h.b16 %v106
    %v374 = vunpack.c.l.b16 %v107
    %v375 = vunpack.c.h.b16 %v107
    %v376 = vunpack.c.l.b16 %v108
    %v377 = vunpack.c.h.b16 %v108
    %v378 = vunpack.c.l.b16 %v109
    %v379 = vunpack.c.h.b16 %v109
    %v380 = vunpack.c.l.b16 %v110
    %v381 = vunpack.c.h.b16 %v110
    %v382 = vunpack.c.l.b16 %v111
    %v383 = vunpack.c.h.b16 %v111
    %v384 = vunpack.c.l.b16 %v112
    %v385 = vunpack.c.h.b16 %v112
    %v386 = vunpack.c.l.b16 %v113
    %v387 = vunpack.c.h.b16 %v113
    %v388 = vunpack.c.l.b16 %v114
    %v389 = vunpack.c.h.b16 %v114
    %v390 = vunpack.c.l.b16 %v115
    %v391 = vunpack.c.h.b16 %v115
    %v392 = vunpack.c.l.b16 %v116
    %v393 = vunpack.c.h.b16 %v116
    %v394 = vunpack.c.l.b16 %v117
    %v395 = vunpack.c.h.b16 %v117
    %v396 = vunpack.c.l.b16 %v118
    %v397 = vunpack.c.h.b16 %v118
    %v398 = vunpack.c.l.b16 %v119
    %v399 = vunpack.c.h.b16 %v119
    %v400 = vunpack.c.l.b16 %v120
    %v401 = vunpack.c.h.b16 %v120
    %v402 = vunpack.c.l.b16 %v121
    %v403 = vunpack.c.h.b16 %v121
    %v404 = vunpack.c.l.b16 %v122
    %v405 = vunpack.c.h.b16 %v122
    %v406 = vunpack.c.l.b16 %v123
    %v407 = vunpack.c.h.b16 %v123
    %v408 = vunpack.c.l.b16 %v124
    %v409 = vunpack.c.h.b16 %v124
    %v410 = vunpack.c.l.b16 %v125
    %v411 = vunpack.c.h.b16 %v125
    %v412 = vunpack.c.l.b16 %v126
    %v413 = vunpack.c.h.b16 %v126
    %v414 = vunpack.c.l.b16 %v127
    %v415 = vunpack.c.h.b16 %v127
    %v416 = vunpack.c.l.b16 %v128
    %v417 = vunpack.c.h.b16 %v128
    %v418 = vunpack.c.l.b16 %v129
    %v419 = vunpack.c.h.b16 %v129
    %v420 = vunpack.c.l.b16 %v130
    %v421 = vunpack.c.h.b16 %v130
    %v422 = vunpack.c.l.b16 %v131
    %v423 = vunpack.c.h.b16 %v131
    %v424 = vunpack.c.l.b16 %v132
    %v425 = vunpack.c.h.b16 %v132
    %v426 = vunpack.c.l.b16 %v133
    %v427 = vunpack.c.h.b16 %v133
    %v428 = vunpack.c.l.b16 %v134
    %v429 = vunpack.c.h.b16 %v134
    %v430 = vunpack.c.l.b16 %v135
    %v431 = vunpack.c.h.b16 %v135
    %v432 = vunpack.c.l.b16 %v136
    %v433 = vunpack.c.h.b16 %v136
    %v434 = vunpack.c.l.b16 %v137
    %v435 = vunpack.c.h.b16 %v137
    %v436 = vunpack.c.l.b16 %v138
    %v437 = vunpack.c.h.b16 %v138
    %v438 = vunpack.c.l.b16 %v139
    %v439 = vunpack.c.h.b16 %v139
    %v440 = vunpack.c.l.b16 %v140
    %v441 = vunpack.c.h.b16 %v140
    %v442 = vunpack.c.l.b16 %v141
    %v443 = vunpack.c.h.b16 %v141
    %v444 = vunpack.c.l.b16 %v142
    %v445 = vunpack.c.h.b16 %v142
    %v446 = vunpack.c.l.b16 %v143
    %v447 = vunpack.c.h.b16 %v143
    %v448 = vunpack.c.l.b16 %v144
    %v449 = vunpack.c.h.b16 %v144
    %v450 = vunpack.c.l.b16 %v145
    %v451 = vunpack.c.h.b16 %v145
    %v452 = vpack.c.b16 %v258, %v256
    %v453 = vpack.c.b16 %v259, %v257
    %v454 = vpack.c.b16 %v262, %v260
    %v455 = vpack.c.b16 %v263, %v261
    %v456 = vpack.c.b16 %v266, %v264
    %v457 = vpack.c.b16 %v267, %v265
    %v458 = vpack.c.b16 %v270, %v268
    %v459 = vpack.c.b16 %v271, %v269
    %v460 = vpack.c.b16 %v274, %v272
    %v461 = vpack.c.b16 %v275, %v273
    %v462 = vpack.c.b16 %v278, %v276
    %v463 = vpack.c.b16 %v279, %v277
    %v464 = vpack.c.b16 %v282, %v280
    %v465 = vpack.c.b16 %v283, %v281
    %v466 = vpack.c.b16 %v286, %v284
    %v467 = vpack.c.b16 %v287, %v285
    %v468 = vpack.c.b16 %v290, %v288
    %v469 = vpack.c.b16 %v291, %v289
    %v470 = vpack.c.b16 %v294, %v292
    %v471 = vpack.c.b16 %v295, %v293
    %v472 = vpack.c.b16 %v298, %v296
    %v473 = vpack.c.b16 %v299, %v297
    %v474 = vpack.c.b16 %v302, %v300
    %v475 = vpack.c.b16 %v303, %v301
    %v476 = vpack.c.b16 %v306, %v304
    %v477 = vpack.c.b16 %v307, %v305
    %v478 = vpack.c.b16 %v310, %v308
    %v479 = vpack.c.b16 %v311, %v309
    %v480 = vpack.c.b16 %v314, %v312
    %v481 = vpack.c.b16 %v315, %v313
    %v482 = vpack.c.b16 %v318, %v316
    %v483 = vpack.c.b16 %v319, %v317
    %v484 = vpack.c.b16 %v322, %v320
    %v485 = vpack.c.b16 %v323, %v321
    %v486 = vpack.c.b16 %v326, %v324
    %v487 = vpack.c.b16 %v327, %v325
    %v488 = vpack.c.b16 %v330, %v328
    %v489 = vpack.c.b16 %v331, %v329
    %v490 = vpack.c.b16 %v334, %v332
    %v491 = vpack.c.b16 %v335, %v333
    %v492 = vpack.c.b16 %v338, %v336
    %v493 = vpack.c.b16 %v339, %v337
    %v494 = vpack.c.b16 %v342, %v340
    %v495 = vpack.c.b16 %v343, %v341
    %v496 = vpack.c.b16 %v346, %v344
    %v497 = vpack.c.b16 %v347, %v345
    %v498 = vpack.c.b16 %v350, %v348
    %v499 = vpack.c.b16 %v351, %v349
    %v500 = vpack.c.b16 %v354, %v352
    %v501 = vpack.c.b16 %v355, %v353
    %v502 = vpack.c.b16 %v358, %v356
    %v503 = vpack.c.b16 %v359, %v357
    %v504 = vpack.c.b16 %v362, %v360
    %v505 = vpack.c.b16 %v363, %v361
    %v506 = vpack.c.b16 %v366, %v364
    %v507 = vpack.c.b16 %v367, %v365
    %v508 = vpack.c.b16 %v370, %v368
    %v509 = vpack.c.b16 %v371, %v369
    %v510 = vpack.c.b16 %v374, %v372
    %v511 = vpack.c.b16 %v375, %v373
    %v512 = vpack.c.b16 %v378, %v376
    %v513 = vpack.c.b16 %v379, %v377
    %v514 = vpack.c.b16 %v382, %v380
    %v515 = vpack.c.b16 %v383, %v381
    %v516 = vpack.c.b16 %v386, %v384
    %v517 = vpack.c.b16 %v387, %v385
    %v518 = vpack.c.b16 %v390, %v388
    %v519 = vpack.c.b16 %v391, %v389
    %v520 = vpack.c.b16 %v394, %v392
    %v521 = vpack.c.b16 %v395, %v393
    %v522 = vpack.c.b16 %v398, %v396
    %v523 = vpack.c.b16 %v399, %v397
    %v524 = vpack.c.b16 %v402, %v400
    %v525 = vpack.c.b16 %v403, %v401
    %v526 = vpack.c.b16 %v406, %v404
    %v527 = vpack.c.b16 %v407, %v405
    %v528 = vpack.c.b16 %v410, %v408
    %v529 = vpack.c.b16 %v411, %v409
    %v530 = vpack.c.b16 %v414, %v412
    %v531 = vpack.c.b16 %v415, %v413
    %v532 = vpack.c.b16 %v418, %v416
    %v533 = vpack.c.b16 %v419, %v417
    %v534 = vpack.c.b16 %v422, %v420
    %v535 = vpack.c.b16 %v423, %v421
    %v536 = vpack.c.b16 %v426, %v424
    %v537 = vpack.c.b16 %v427, %v425
    %v538 = vpack.c.b16 %v430, %v428
    %v539 = vpack.c.b16 %v431, %v429
    %v540 = vpack.c.b16 %v434, %v432
    %v541 = vpack.c.b16 %v435, %v433
    %v542 = vpack.c.b16 %v438, %v436
    %v543 = vpack.c.b16 %v439, %v437
    %v544 = vpack.c.b16 %v442, %v440
    %v545 = vpack.c.b16 %v443, %v441
    %v546 = vpack.c.b16 %v446, %v444
    %v547 = vpack.c.b16 %v447, %v445
    %v548 = vpack.c.b16 %v450, %v448
    %v549 = vpack.c.b16 %v451, %v449
    %vm648 = vcmask 130048
    %v650 = vsel %vm648, %v47, 0
    %652 = vmatprep.subr.bf16.mxu0 %v453
    %653 = vmatpush1.bf16.msra.mxu0 %v452
    %654 = vmatprep.subr.bf16.mxu0 %v455
    %655 = vmatpush1.bf16.msra.mxu0 %v454
    %656 = vmatprep.subr.bf16.mxu0 %v457
    %657 = vmatpush1.bf16.msra.mxu0 %v456
    %658 = vmatprep.subr.bf16.mxu0 %v459
    %659 = vmatpush1.bf16.msra.mxu0 %v458
    %660 = vmatprep.subr.bf16.mxu0 %v461
    %661 = vmatpush1.bf16.msra.mxu0 %v460
    %662 = vmatprep.subr.bf16.mxu0 %v463
    %663 = vmatpush1.bf16.msra.mxu0 %v462
    %664 = vmatprep.subr.bf16.mxu0 %v465
    %665 = vmatpush1.bf16.msra.mxu0 %v464
    %666 = vmatprep.subr.bf16.mxu0 %v467
    %667 = vmatpush1.bf16.msra.mxu0 %v466
    %668 = vmatprep.subr.bf16.mxu0 %v469
    %669 = vmatpush1.bf16.msra.mxu0 %v468
    %670 = vmatprep.subr.bf16.mxu0 %v471
    %671 = vmatpush1.bf16.msra.mxu0 %v470
    %672 = vmatprep.subr.bf16.mxu0 %v473
    %673 = vmatpush1.bf16.msra.mxu0 %v472
    %674 = vmatprep.subr.bf16.mxu0 %v475
    %675 = vmatpush1.bf16.msra.mxu0 %v474
    %676 = vmatprep.subr.bf16.mxu0 %v477
    %677 = vmatpush1.bf16.msra.mxu0 %v476
    %678 = vmatprep.subr.bf16.mxu0 %v479
    %679 = vmatpush1.bf16.msra.mxu0 %v478
    %680 = vmatprep.subr.bf16.mxu0 %v481
    %681 = vmatpush1.bf16.msra.mxu0 %v480
    %682 = vmatprep.subr.bf16.mxu0 %v483
    %683 = vmatpush1.bf16.msra.mxu0 %v482
    %684 = vmatprep.mubr.bf16.mxu0 %v42
    %685 = vmatmul.mubr.bf16.gmra.mrb[0].mxu0 %v41
    %v686 = vpop.f32.mrb[0].mxu0
    %v687 = vadd.f32 %v151, %v686
    %v688 = vpop.f32.mrb[0].mxu0
    %v689 = vadd.f32 %v155, %v688
    %v690 = vpop.f32.mrb[0].mxu0
    %v691 = vpop.f32.mrb[0].mxu0
    %692 = vdwg.mxu0
    %693 = vmatprep.subr.bf16.mxu0 %v485
    %694 = vmatpush1.bf16.msra.mxu0 %v484
    %695 = vmatprep.subr.bf16.mxu0 %v487
    %696 = vmatpush1.bf16.msra.mxu0 %v486
    %697 = vmatprep.subr.bf16.mxu0 %v489
    %698 = vmatpush1.bf16.msra.mxu0 %v488
    %699 = vmatprep.subr.bf16.mxu0 %v491
    %700 = vmatpush1.bf16.msra.mxu0 %v490
    %701 = vmatprep.subr.bf16.mxu0 %v493
    %702 = vmatpush1.bf16.msra.mxu0 %v492
    %703 = vmatprep.subr.bf16.mxu0 %v495
    %704 = vmatpush1.bf16.msra.mxu0 %v494
    %705 = vmatprep.subr.bf16.mxu0 %v497
    %706 = vmatpush1.bf16.msra.mxu0 %v496
    %707 = vmatprep.subr.bf16.mxu0 %v499
    %708 = vmatpush1.bf16.msra.mxu0 %v498
    %709 = vmatprep.subr.bf16.mxu0 %v501
    %710 = vmatpush1.bf16.msra.mxu0 %v500
    %711 = vmatprep.subr.bf16.mxu0 %v503
    %712 = vmatpush1.bf16.msra.mxu0 %v502
    %713 = vmatprep.subr.bf16.mxu0 %v505
    %714 = vmatpush1.bf16.msra.mxu0 %v504
    %715 = vmatprep.subr.bf16.mxu0 %v507
    %716 = vmatpush1.bf16.msra.mxu0 %v506
    %717 = vmatprep.subr.bf16.mxu0 %v509
    %718 = vmatpush1.bf16.msra.mxu0 %v508
    %719 = vmatprep.subr.bf16.mxu0 %v511
    %720 = vmatpush1.bf16.msra.mxu0 %v510
    %721 = vmatprep.subr.bf16.mxu0 %v513
    %722 = vmatpush1.bf16.msra.mxu0 %v512
    %723 = vmatprep.subr.bf16.mxu0 %v515
    %724 = vmatpush1.bf16.msra.mxu0 %v514
    %725 = vmatprep.mubr.bf16.mxu0 %v44
    %726 = vmatmul.mubr.bf16.gmra.mrb[0].mxu0 %v43
    %v727 = vpop.f32.mrb[0].mxu0
    %v728 = vadd.f32 %v687, %v727
    %v729 = vpop.f32.mrb[0].mxu0
    %v730 = vadd.f32 %v689, %v729
    %v731 = vpop.f32.mrb[0].mxu0
    %v732 = vpop.f32.mrb[0].mxu0
    %733 = vdwg.mxu0
    %734 = vmatprep.subr.bf16.mxu0 %v517
    %735 = vmatpush1.bf16.msra.mxu0 %v516
    %736 = vmatprep.subr.bf16.mxu0 %v519
    %737 = vmatpush1.bf16.msra.mxu0 %v518
    %738 = vmatprep.subr.bf16.mxu0 %v521
    %739 = vmatpush1.bf16.msra.mxu0 %v520
    %740 = vmatprep.subr.bf16.mxu0 %v523
    %741 = vmatpush1.bf16.msra.mxu0 %v522
    %742 = vmatprep.subr.bf16.mxu0 %v525
    %743 = vmatpush1.bf16.msra.mxu0 %v524
    %744 = vmatprep.subr.bf16.mxu0 %v527
    %745 = vmatpush1.bf16.msra.mxu0 %v526
    %746 = vmatprep.subr.bf16.mxu0 %v529
    %747 = vmatpush1.bf16.msra.mxu0 %v528
    %748 = vmatprep.subr.bf16.mxu0 %v531
    %749 = vmatpush1.bf16.msra.mxu0 %v530
    %750 = vmatprep.subr.bf16.mxu0 %v533
    %751 = vmatpush1.bf16.msra.mxu0 %v532
    %752 = vmatprep.subr.bf16.mxu0 %v535
    %753 = vmatpush1.bf16.msra.mxu0 %v534
    %754 = vmatprep.subr.bf16.mxu0 %v537
    %755 = vmatpush1.bf16.msra.mxu0 %v536
    %756 = vmatprep.subr.bf16.mxu0 %v539
    %757 = vmatpush1.bf16.msra.mxu0 %v538
    %758 = vmatprep.subr.bf16.mxu0 %v541
    %759 = vmatpush1.bf16.msra.mxu0 %v540
    %760 = vmatprep.subr.bf16.mxu0 %v543
    %761 = vmatpush1.bf16.msra.mxu0 %v542
    %762 = vmatprep.subr.bf16.mxu0 %v545
    %763 = vmatpush1.bf16.msra.mxu0 %v544
    %764 = vmatprep.subr.bf16.mxu0 %v547
    %765 = vmatpush1.bf16.msra.mxu0 %v546
    %766 = vmatprep.mubr.bf16.mxu0 %v46
    %767 = vmatmul.mubr.bf16.gmra.mrb[0].mxu0 %v45
    %v768 = vpop.f32.mrb[0].mxu0
    %v769 = vadd.f32 %v728, %v768
    %v770 = vpop.f32.mrb[0].mxu0
    %v771 = vadd.f32 %v730, %v770
    %v772 = vpop.f32.mrb[0].mxu0
    %v773 = vpop.f32.mrb[0].mxu0
    %774 = vdwg.mxu0
    %775 = vmatprep.subr.bf16.mxu0 %v549
    %776 = vmatpush1.bf16.msra.mxu0 %v548
    %777 = vmatprep.subr.bf16.mxu0 0
    %778 = vmatpush1.bf16.msra.mxu0 0
    %779 = vmatprep.subr.bf16.mxu0 0
    %780 = vmatpush1.bf16.msra.mxu0 0
    %781 = vmatprep.subr.bf16.mxu0 0
    %782 = vmatpush1.bf16.msra.mxu0 0
    %783 = vmatprep.subr.bf16.mxu0 0
    %784 = vmatpush1.bf16.msra.mxu0 0
    %785 = vmatprep.subr.bf16.mxu0 0
    %786 = vmatpush1.bf16.msra.mxu0 0
    %787 = vmatprep.subr.bf16.mxu0 0
    %788 = vmatpush1.bf16.msra.mxu0 0
    %789 = vmatprep.subr.bf16.mxu0 0
    %790 = vmatpush1.bf16.msra.mxu0 0
    %791 = vmatprep.subr.bf16.mxu0 0
    %792 = vmatpush1.bf16.msra.mxu0 0
    %793 = vmatprep.subr.bf16.mxu0 0
    %794 = vmatpush1.bf16.msra.mxu0 0
    %795 = vmatprep.subr.bf16.mxu0 0
    %796 = vmatpush1.bf16.msra.mxu0 0
    %797 = vmatprep.subr.bf16.mxu0 0
    %798 = vmatpush1.bf16.msra.mxu0 0
    %799 = vmatprep.subr.bf16.mxu0 0
    %800 = vmatpush1.bf16.msra.mxu0 0
    %801 = vmatprep.subr.bf16.mxu0 0
    %802 = vmatpush1.bf16.msra.mxu0 0
    %803 = vmatprep.subr.bf16.mxu0 0
    %804 = vmatpush1.bf16.msra.mxu0 0
    %805 = vmatprep.subr.bf16.mxu0 0
    %806 = vmatpush1.bf16.msra.mxu0 0
    %807 = vmatprep.mubr.bf16.mxu0 0
    %808 = vmatmul.mubr.bf16.gmra.mrb[0].mxu0 %v650
    %v809 = vpop.f32.mrb[0].mxu0
    %v810 = vadd.f32 %v769, %v809
    %v811 = vpop.f32.mrb[0].mxu0
    %v812 = vadd.f32 %v771, %v811
    %v813 = vpop.f32.mrb[0].mxu0
    %v814 = vpop.f32.mrb[0].mxu0
    %815 = vdwg.mxu0
    %v816 = vmax.f32 %v810, 0.0
    %v817 = vmax.f32 %v812, 0.0
    %v818 = vpack.c.bf16 %v816, %v816
    %v819 = vpack.c.bf16 %v817, %v817
    %v820 = vld [vmem:[%s3] sm:$0xf]
    %v821 = vld [vmem:[%s3 + $0x4] sm:$0xf]
    %v822 = vld [vmem:[%s3 + $0x8] sm:$0xf]
    %v823 = vld [vmem:[%s3 + $0xc] sm:$0xf]
    %v824 = vld [vmem:[%s3 + $0x10] sm:$0xf]
    %v825 = vld [vmem:[%s3 + $0x14] sm:$0xf]
    %v826 = vld [vmem:[%s3 + $0x18] sm:$0xf]
    %v827 = vld [vmem:[%s3 + $0x1c] sm:$0xf]
    %v828 = vld [vmem:[%s3 + $0x20] sm:$0xf]
    %v829 = vld [vmem:[%s3 + $0x24] sm:$0xf]
    %v830 = vld [vmem:[%s3 + $0x28] sm:$0xf]
    %v831 = vld [vmem:[%s3 + $0x2c] sm:$0xf]
    %v832 = vld [vmem:[%s3 + $0x30] sm:$0xf]
    %v833 = vld [vmem:[%s3 + $0x34] sm:$0xf]
    %v834 = vld [vmem:[%s3 + $0x38] sm:$0xf]
    %v835 = vld [vmem:[%s3 + $0x3c] sm:$0xf]
    %v836 = vld [vmem:[%s3 + $0x40] sm:$0xf]
    %v837 = vld [vmem:[%s3 + $0x44] sm:$0xf]
    %v838 = vld [vmem:[%s3 + $0x48] sm:$0xf]
    %v839 = vld [vmem:[%s3 + $0x4c] sm:$0xf]
    %v840 = vld [vmem:[%s3 + $0x50] sm:$0xf]
    %v841 = vld [vmem:[%s3 + $0x54] sm:$0xf]
    %v842 = vld [vmem:[%s3 + $0x58] sm:$0xf]
    %v843 = vld [vmem:[%s3 + $0x5c] sm:$0xf]
    %v844 = vld [vmem:[%s3 + $0x60] sm:$0xf]
    %v845 = vld [vmem:[%s3 + $0x64] sm:$0xf]
    %v846 = vld [vmem:[%s3 + $0x68] sm:$0xf]
    %v847 = vld [vmem:[%s3 + $0x6c] sm:$0xf]
    %v848 = vld [vmem:[%s3 + $0x70] sm:$0xf]
    %v849 = vld [vmem:[%s3 + $0x74] sm:$0xf]
    %v850 = vld [vmem:[%s3 + $0x78] sm:$0xf]
    %v851 = vld [vmem:[%s3 + $0x7c] sm:$0xf]
    %v852 = vld [vmem:[%s4] sm:$0x1]
    %v854 = vlaneseq
    %v855 = vshrl.u32 %v854, 7
    %v856 = vsub.s32 0, %v855
    %v857 = vrot.slane %v852, %v856
    %v891 = vunpack.c.l.b16 %v820
    %v892 = vunpack.c.l.b16 %v821
    %v893 = vunpack.c.l.b16 %v822
    %v894 = vunpack.c.l.b16 %v823
    %v895 = vunpack.c.l.b16 %v824
    %v896 = vunpack.c.l.b16 %v825
    %v897 = vunpack.c.l.b16 %v826
    %v898 = vunpack.c.l.b16 %v827
    %v899 = vunpack.c.l.b16 %v828
    %v900 = vunpack.c.l.b16 %v829
    %v901 = vunpack.c.l.b16 %v830
    %v902 = vunpack.c.l.b16 %v831
    %v903 = vunpack.c.l.b16 %v832
    %v904 = vunpack.c.l.b16 %v833
    %v905 = vunpack.c.l.b16 %v834
    %v906 = vunpack.c.l.b16 %v835
    %v907 = vunpack.c.l.b16 %v836
    %v908 = vunpack.c.l.b16 %v837
    %v909 = vunpack.c.l.b16 %v838
    %v910 = vunpack.c.l.b16 %v839
    %v911 = vunpack.c.l.b16 %v840
    %v912 = vunpack.c.l.b16 %v841
    %v913 = vunpack.c.l.b16 %v842
    %v914 = vunpack.c.l.b16 %v843
    %v915 = vunpack.c.l.b16 %v844
    %v916 = vunpack.c.l.b16 %v845
    %v917 = vunpack.c.l.b16 %v846
    %v918 = vunpack.c.l.b16 %v847
    %v919 = vunpack.c.l.b16 %v848
    %v920 = vunpack.c.l.b16 %v849
    %v921 = vunpack.c.l.b16 %v850
    %v922 = vunpack.c.l.b16 %v851
    %v923 = vpack.c.b16 %v892, %v891
    %v924 = vpack.c.b16 %v894, %v893
    %v925 = vpack.c.b16 %v896, %v895
    %v926 = vpack.c.b16 %v898, %v897
    %v927 = vpack.c.b16 %v900, %v899
    %v928 = vpack.c.b16 %v902, %v901
    %v929 = vpack.c.b16 %v904, %v903
    %v930 = vpack.c.b16 %v906, %v905
    %v931 = vpack.c.b16 %v908, %v907
    %v932 = vpack.c.b16 %v910, %v909
    %v933 = vpack.c.b16 %v912, %v911
    %v934 = vpack.c.b16 %v914, %v913
    %v935 = vpack.c.b16 %v916, %v915
    %v936 = vpack.c.b16 %v918, %v917
    %v937 = vpack.c.b16 %v920, %v919
    %v938 = vpack.c.b16 %v922, %v921
    %955 = vmatprep.subr.bf16.mxu0 0
    %956 = vmatpush1.bf16.msra.mxu0 %v923
    %957 = vmatprep.subr.bf16.mxu0 0
    %958 = vmatpush1.bf16.msra.mxu0 %v924
    %959 = vmatprep.subr.bf16.mxu0 0
    %960 = vmatpush1.bf16.msra.mxu0 %v925
    %961 = vmatprep.subr.bf16.mxu0 0
    %962 = vmatpush1.bf16.msra.mxu0 %v926
    %963 = vmatprep.subr.bf16.mxu0 0
    %964 = vmatpush1.bf16.msra.mxu0 %v927
    %965 = vmatprep.subr.bf16.mxu0 0
    %966 = vmatpush1.bf16.msra.mxu0 %v928
    %967 = vmatprep.subr.bf16.mxu0 0
    %968 = vmatpush1.bf16.msra.mxu0 %v929
    %969 = vmatprep.subr.bf16.mxu0 0
    %970 = vmatpush1.bf16.msra.mxu0 %v930
    %971 = vmatprep.subr.bf16.mxu0 0
    %972 = vmatpush1.bf16.msra.mxu0 %v931
    %973 = vmatprep.subr.bf16.mxu0 0
    %974 = vmatpush1.bf16.msra.mxu0 %v932
    %975 = vmatprep.subr.bf16.mxu0 0
    %976 = vmatpush1.bf16.msra.mxu0 %v933
    %977 = vmatprep.subr.bf16.mxu0 0
    %978 = vmatpush1.bf16.msra.mxu0 %v934
    %979 = vmatprep.subr.bf16.mxu0 0
    %980 = vmatpush1.bf16.msra.mxu0 %v935
    %981 = vmatprep.subr.bf16.mxu0 0
    %982 = vmatpush1.bf16.msra.mxu0 %v936
    %983 = vmatprep.subr.bf16.mxu0 0
    %984 = vmatpush1.bf16.msra.mxu0 %v937
    %985 = vmatprep.subr.bf16.mxu0 0
    %986 = vmatpush1.bf16.msra.mxu0 %v938
    %987 = vmatprep.mubr.bf16.mxu0 %v819
    %988 = vmatmul.mubr.bf16.gmra.mrb[0].mxu0 %v818
    %v989 = vpop.f32.mrb[0].mxu0
    %v990 = vadd.f32 %v857, %v989
    %v991 = vpop.f32.mrb[0].mxu0
    %v992 = vpop.f32.mrb[0].mxu0
    %v993 = vpop.f32.mrb[0].mxu0
    %994 = vdwg.mxu0
    %v995 = vmax.f32 %v990, 0.0
    %v996 = vpack.c.bf16 %v995, %v995
    %v997 = vld [vmem:[%s5] sm:$0xf]
    %v998 = vld [vmem:[%s5 + $0x4] sm:$0xf]
    %v999 = vld [vmem:[%s5 + $0x8] sm:$0xf]
    %v1000 = vld [vmem:[%s5 + $0xc] sm:$0xf]
    %v1001 = vld [vmem:[%s5 + $0x10] sm:$0xf]
    %v1002 = vld [vmem:[%s5 + $0x14] sm:$0xf]
    %v1003 = vld [vmem:[%s5 + $0x18] sm:$0xf]
    %v1004 = vld [vmem:[%s5 + $0x1c] sm:$0xf]
    %v1005 = vld [vmem:[%s5 + $0x20] sm:$0xf]
    %v1006 = vld [vmem:[%s5 + $0x24] sm:$0xf]
    %v1007 = vld [vmem:[%s5 + $0x28] sm:$0xf]
    %v1008 = vld [vmem:[%s5 + $0x2c] sm:$0xf]
    %v1009 = vld [vmem:[%s5 + $0x30] sm:$0xf]
    %v1010 = vld [vmem:[%s5 + $0x34] sm:$0xf]
    %v1011 = vld [vmem:[%s5 + $0x38] sm:$0xf]
    %v1012 = vld [vmem:[%s5 + $0x3c] sm:$0xf]
    %v1013 = vld [vmem:[%s6] sm:$0x1]
    %v1015 = vlaneseq
    %v1016 = vshrl.u32 %v1015, 7
    %v1017 = vsub.s32 0, %v1016
    %v1018 = vrot.slane %v1013, %v1017
    %v1036 = vunpack.c.l.b16 %v997
    %v1037 = vunpack.c.l.b16 %v998
    %v1038 = vunpack.c.l.b16 %v999
    %v1039 = vunpack.c.l.b16 %v1000
    %v1040 = vunpack.c.l.b16 %v1001
    %v1041 = vunpack.c.l.b16 %v1002
    %v1042 = vunpack.c.l.b16 %v1003
    %v1043 = vunpack.c.l.b16 %v1004
    %v1044 = vunpack.c.l.b16 %v1005
    %v1045 = vunpack.c.l.b16 %v1006
    %v1046 = vunpack.c.l.b16 %v1007
    %v1047 = vunpack.c.l.b16 %v1008
    %v1048 = vunpack.c.l.b16 %v1009
    %v1049 = vunpack.c.l.b16 %v1010
    %v1050 = vunpack.c.l.b16 %v1011
    %v1051 = vunpack.c.l.b16 %v1012
    %v1052 = vpack.c.b16 %v1037, %v1036
    %v1053 = vpack.c.b16 %v1039, %v1038
    %v1054 = vpack.c.b16 %v1041, %v1040
    %v1055 = vpack.c.b16 %v1043, %v1042
    %v1056 = vpack.c.b16 %v1045, %v1044
    %v1057 = vpack.c.b16 %v1047, %v1046
    %v1058 = vpack.c.b16 %v1049, %v1048
    %v1059 = vpack.c.b16 %v1051, %v1050
    %1068 = vmatprep.subr.bf16.mxu0 0
    %1069 = vmatpush1.bf16.msra.mxu0 %v1052
    %1070 = vmatprep.subr.bf16.mxu0 0
    %1071 = vmatpush1.bf16.msra.mxu0 %v1053
    %1072 = vmatprep.subr.bf16.mxu0 0
    %1073 = vmatpush1.bf16.msra.mxu0 %v1054
    %1074 = vmatprep.subr.bf16.mxu0 0
    %1075 = vmatpush1.bf16.msra.mxu0 %v1055
    %1076 = vmatprep.subr.bf16.mxu0 0
    %1077 = vmatpush1.bf16.msra.mxu0 %v1056
    %1078 = vmatprep.subr.bf16.mxu0 0
    %1079 = vmatpush1.bf16.msra.mxu0 %v1057
    %1080 = vmatprep.subr.bf16.mxu0 0
    %1081 = vmatpush1.bf16.msra.mxu0 %v1058
    %1082 = vmatprep.subr.bf16.mxu0 0
    %1083 = vmatpush1.bf16.msra.mxu0 %v1059
    %1084 = vmatprep.subr.bf16.mxu0 0
    %1085 = vmatpush1.bf16.msra.mxu0 0
    %1086 = vmatprep.subr.bf16.mxu0 0
    %1087 = vmatpush1.bf16.msra.mxu0 0
    %1088 = vmatprep.subr.bf16.mxu0 0
    %1089 = vmatpush1.bf16.msra.mxu0 0
    %1090 = vmatprep.subr.bf16.mxu0 0
    %1091 = vmatpush1.bf16.msra.mxu0 0
    %1092 = vmatprep.subr.bf16.mxu0 0
    %1093 = vmatpush1.bf16.msra.mxu0 0
    %1094 = vmatprep.subr.bf16.mxu0 0
    %1095 = vmatpush1.bf16.msra.mxu0 0
    %1096 = vmatprep.subr.bf16.mxu0 0
    %1097 = vmatpush1.bf16.msra.mxu0 0
    %1098 = vmatprep.subr.bf16.mxu0 0
    %1099 = vmatpush1.bf16.msra.mxu0 0
    %1100 = vmatprep.mubr.bf16.mxu0 0
    %1101 = vmatmul.mubr.bf16.gmra.mrb[0].mxu0 %v996
    %v1102 = vpop.f32.mrb[0].mxu0
    %v1103 = vadd.f32 %v1018, %v1102
    %v1104 = vpop.f32.mrb[0].mxu0
    %v1105 = vpop.f32.mrb[0].mxu0
    %v1106 = vpop.f32.mrb[0].mxu0
    %1107 = vdwg.mxu0
    %v1108 = vmax.f32 %v1103, 0.0
    %v1109 = vpack.c.bf16 %v1108, %v1108
    %v1110 = vld [vmem:[%s7] sm:$0xf]
    %v1111 = vld [vmem:[%s7 + $0x4] sm:$0xf]
    %v1112 = vld [vmem:[%s7 + $0x8] sm:$0xf]
    %v1113 = vld [vmem:[%s7 + $0xc] sm:$0xf]
    %v1114 = vld [vmem:[%s7 + $0x10] sm:$0xf]
    %v1115 = vld [vmem:[%s7 + $0x14] sm:$0xf]
    %v1116 = vld [vmem:[%s7 + $0x18] sm:$0xf]
    %v1117 = vld [vmem:[%s7 + $0x1c] sm:$0xf]
    %v1118 = vld [vmem:[%s8] sm:$0x1]
    %v1120 = vlaneseq
    %v1121 = vshrl.u32 %v1120, 7
    %v1122 = vsub.s32 0, %v1121
    %v1123 = vrot.slane %v1118, %v1122
    %v1133 = vunpack.c.l.b16 %v1110
    %v1134 = vunpack.c.l.b16 %v1111
    %v1135 = vunpack.c.l.b16 %v1112
    %v1136 = vunpack.c.l.b16 %v1113
    %v1137 = vunpack.c.l.b16 %v1114
    %v1138 = vunpack.c.l.b16 %v1115
    %v1139 = vunpack.c.l.b16 %v1116
    %v1140 = vunpack.c.l.b16 %v1117
    %v1141 = vpack.c.b16 %v1134, %v1133
    %v1142 = vpack.c.b16 %v1136, %v1135
    %v1143 = vpack.c.b16 %v1138, %v1137
    %v1144 = vpack.c.b16 %v1140, %v1139
    %vm1149 = vcmask 523264
    %v1151 = vsel %vm1149, %v1109, 0
    %1153 = vmatprep.subr.bf16.mxu0 0
    %1154 = vmatpush1.bf16.msra.mxu0 %v1141
    %1155 = vmatprep.subr.bf16.mxu0 0
    %1156 = vmatpush1.bf16.msra.mxu0 %v1142
    %1157 = vmatprep.subr.bf16.mxu0 0
    %1158 = vmatpush1.bf16.msra.mxu0 %v1143
    %1159 = vmatprep.subr.bf16.mxu0 0
    %1160 = vmatpush1.bf16.msra.mxu0 %v1144
    %1161 = vmatprep.subr.bf16.mxu0 0
    %1162 = vmatpush1.bf16.msra.mxu0 0
    %1163 = vmatprep.subr.bf16.mxu0 0
    %1164 = vmatpush1.bf16.msra.mxu0 0
    %1165 = vmatprep.subr.bf16.mxu0 0
    %1166 = vmatpush1.bf16.msra.mxu0 0
    %1167 = vmatprep.subr.bf16.mxu0 0
    %1168 = vmatpush1.bf16.msra.mxu0 0
    %1169 = vmatprep.subr.bf16.mxu0 0
    %1170 = vmatpush1.bf16.msra.mxu0 0
    %1171 = vmatprep.subr.bf16.mxu0 0
    %1172 = vmatpush1.bf16.msra.mxu0 0
    %1173 = vmatprep.subr.bf16.mxu0 0
    %1174 = vmatpush1.bf16.msra.mxu0 0
    %1175 = vmatprep.subr.bf16.mxu0 0
    %1176 = vmatpush1.bf16.msra.mxu0 0
    %1177 = vmatprep.subr.bf16.mxu0 0
    %1178 = vmatpush1.bf16.msra.mxu0 0
    %1179 = vmatprep.subr.bf16.mxu0 0
    %1180 = vmatpush1.bf16.msra.mxu0 0
    %1181 = vmatprep.subr.bf16.mxu0 0
    %1182 = vmatpush1.bf16.msra.mxu0 0
    %1183 = vmatprep.subr.bf16.mxu0 0
    %1184 = vmatpush1.bf16.msra.mxu0 0
    %1185 = vmatprep.mubr.bf16.mxu0 0
    %1186 = vmatmul.mubr.bf16.gmra.mrb[0].mxu0 %v1151
    %v1187 = vpop.f32.mrb[0].mxu0
    %v1188 = vadd.f32 %v1123, %v1187
    %v1189 = vpop.f32.mrb[0].mxu0
    %v1190 = vpop.f32.mrb[0].mxu0
    %v1191 = vpop.f32.mrb[0].mxu0
    %1192 = vdwg.mxu0
    %vm1193 = vcmask 80896
    %1194 = vst.msk [vmem:[#allocation2] sm:$0xff] %vm1193, %v1188
    // Predicated region
    $region38: #{fashion_mnist_net.1} parent=1 // pred_check
      _
    $region39: #{fashion_mnist_net.1} parent=1 // pred_check_branch
      %1196 = sbr.rel (0) target = $region41
    $region40: #{fashion_mnist_net.1} parent=1 // pred_region
      %s1198 = ssub.s32 128, 128
      %1199 = vsyncadd [#allocation3], %s1198
      %s1201 = sshll.u32 [#allocation2], 4
      %s1202 = int_to_ptr.vmem [resolvable:$true] %s1201
      %1204 = dma.vmem_to_hbm [thread:$0]  %s1202, 128, %s9, [#allocation3]
    $region41: #{fashion_mnist_net.1} parent=1 // pred_fallthru
      _
    // Predicated region
    $region42: #{fashion_mnist_net.1} parent=1 // pred_check
      _
    $region43: #{fashion_mnist_net.1} parent=1 // pred_check_branch
      %1206 = sbr.rel (0) target = $region45
    $region44: #{fashion_mnist_net.1} parent=1 // pred_region
      %1207 = dma.done [#allocation3], 128
    $region45: #{fashion_mnist_net.1} parent=1 // pred_fallthru
      _
    %1208 = vsyncpa [#allocation3], 1

</llo_original>
